<compile_context>
chip_gen: v7x
topology: tpu7x:2x2x1
jax: 0.10.0
libtpu: 0.0.40
codegen_flags: <defaults>
</compile_context>

<pallas_src>
import functools
import math

import jax
import jax.numpy as jnp
from jax.experimental import pallas as pl
from jax.experimental.pallas import tpu as pltpu

EPS_PPO = 1e-5

_VMEM_LIMIT = 32 * 1024 * 1024        # explicit scoped-VMEM cap (safe on v5e/v6e/v7x)
_TILE_BYTES_TARGET = 2 * 1024 * 1024  # ~2 MiB per f32 input tile (>=512-lane regime)


# ---------------------------------------------------------------------------
# Layout / tiling helpers (host-side Python, build time only).
# ---------------------------------------------------------------------------
def _lane_layout(B, H, max_lanes=2048, min_rows=16):
    """Lane width L for viewing a row-major (B, H) array as (B*H//L, L).

    L is a multiple of H (lane c always belongs to head c % H) and, when possible,
    a multiple of 128 (full lane occupancy) dividing B*H.  Prefer the largest L
    that still leaves >= min_rows rows so the row axis can be tiled into >= 2
    blocks (dual-TensorCore sharding on v7x).  Fallback: L = H.
    """
    total = B * H
    base = (128 * H) // math.gcd(128, H)          # lcm(128, H)
    cap = min(max_lanes, total)
    best = 0
    m = (cap // base) * base
    while m >= base:
        if total % m == 0:
            if best == 0:
                best = m                           # largest valid (any row count)
            if total // m >= min_rows:
                return m
        m -= base
    return best if best else H


def _row_tile(rows, lanes, max_tile_bytes=_TILE_BYTES_TARGET):
    """Row-tile size: a multiple of 8 dividing `rows`, sized to ~max_tile_bytes per
    f32 tile, and capped at rows//2 when possible so the fully-parallel grid has
    >= 2 steps (both v7x TensorCores get work).  If `rows` is not a multiple of 8
    the only legal block is the full axis."""
    if rows % 8 != 0:
        return rows
    target = max(8, (max_tile_bytes // (lanes * 4)) // 8 * 8)
    cap = min(rows if rows < 16 else rows // 2, target)
    best, t = 8, 8
    while t <= cap:
        if rows % t == 0:
            best = t
        t += 8
    return best


# ---------------------------------------------------------------------------
# Kernel group 1: get_advantages
#   adv = returns[:-1] - value_preds[:-1]
#   normalized per head over the flattened T*N axis (unbiased std, torch default).
# Inputs stay in their native (T+1, N, H) layout, viewed as (T+1, N*H); the grid
# only covers rows [0, T) so the bootstrap row is never read.
# ---------------------------------------------------------------------------
def _adv_stats_kernel(r_ref, v_ref, sum_ref, m2_ref):
    adv = r_ref[...].astype(jnp.float32) - v_ref[...].astype(jnp.float32)   # (TT, NH)
    tt = adv.shape[0]
    s = jnp.sum(adv, axis=0, keepdims=True)                                 # (1, NH)
    mu = s * (1.0 / tt)
    d = adv - mu                                                            # centered
    sum_ref[...] = s[None]                                                  # (1, 1, NH)
    m2_ref[...] = jnp.sum(d * d, axis=0, keepdims=True)[None]


def _adv_norm_kernel(r_ref, v_ref, mean_ref, inv_ref, out_ref):
    adv = r_ref[...].astype(jnp.float32) - v_ref[...].astype(jnp.float32)
    out_ref[...] = (adv - mean_ref[...]) * inv_ref[...]


def _adv_raw_kernel(r_ref, v_ref, out_ref):
    out_ref[...] = r_ref[...].astype(jnp.float32) - v_ref[...].astype(jnp.float32)


def get_advantages(returns, value_preds, use_normalized_advantage=True, *, row_block=None):
    Tp1, N, H = returns.shape
    T = Tp1 - 1
    NH = N * H
    r2 = returns.reshape(Tp1, NH)          # free reshape, no relayout
    v2 = value_preds.reshape(Tp1, NH)

    if T % 8 == 0:
        tt = row_block if (row_block and T % row_block == 0 and row_block % 8 == 0) \
            else _row_tile(T, NH)
    else:
        # Ragged T: slice off the bootstrap row host-side and use one full block.
        # TODO(synk): mask the ragged tail in-kernel to avoid this extra copy.
        r2, v2 = r2[:T], v2[:T]
        tt = T
    n_t = T // tt

    params = pltpu.CompilerParams(dimension_semantics=("parallel",),
                                  vmem_limit_bytes=_VMEM_LIMIT)
    in_spec = pl.BlockSpec((tt, NH), lambda i: (i, 0))
    row_spec = pl.BlockSpec((tt, NH), lambda i: (i, 0))

    if not use_normalized_advantage:
        adv2 = pl.pallas_call(
            _adv_raw_kernel,
            grid=(n_t,),
            out_shape=jax.ShapeDtypeStruct((T, NH), jnp.float32),
            in_specs=[in_spec, in_spec],
            out_specs=row_spec,
            compiler_params=params,
            cost_estimate=pl.CostEstimate(flops=T * NH, transcendentals=0,
                                          bytes_accessed=3 * T * NH * 4),
        )(r2, v2)
        return adv2.reshape(T, N, H)

    # Pass 1: per (tile, lane) sum and centered sum-of-squares.
    stat_spec = pl.BlockSpec((1, 1, NH), lambda i: (i, 0, 0))
    sums, m2s = pl.pallas_call(
        _adv_stats_kernel,
        grid=(n_t,),
        out_shape=(jax.ShapeDtypeStruct((n_t, 1, NH), jnp.float32),
                   jax.ShapeDtypeStruct((n_t, 1, NH), jnp.float32)),
        in_specs=[in_spec, in_spec],
        out_specs=(stat_spec, stat_spec),
        compiler_params=params,
        cost_estimate=pl.CostEstimate(flops=5 * T * NH, transcendentals=0,
                                      bytes_accessed=(2 * T * NH + 2 * n_t * NH) * 4),
    )(r2, v2)

    # Exact per-head stats via Chan parallel-variance combine (O(n_t*N*H) plain JAX).
    cnt = T * N
    sums3 = sums.reshape(n_t, N, H)
    m2s3 = m2s.reshape(n_t, N, H)
    mean_h = sums3.sum(axis=(0, 1)) / cnt                                   # (H,)
    grp_mean = sums3 / tt
    m2_h = m2s3.sum(axis=(0, 1)) + (tt * (grp_mean - mean_h) ** 2).sum(axis=(0, 1))
    std_h = jnp.sqrt(m2_h / max(cnt - 1, 1))                                # unbiased (torch)
    inv_h = 1.0 / (std_h + EPS_PPO)
    mean_l = jnp.tile(mean_h, N).reshape(1, NH)                             # lane c -> head c % H
    inv_l = jnp.tile(inv_h, N).reshape(1, NH)

    # Pass 2: recompute adv and normalize (tiled, pipelined).
    bcast_spec = pl.BlockSpec((1, NH), lambda i: (0, 0))
    adv2 = pl.pallas_call(
        _adv_norm_kernel,
        grid=(n_t,),
        out_shape=jax.ShapeDtypeStruct((T, NH), jnp.float32),
        in_specs=[in_spec, in_spec, bcast_spec, bcast_spec],
        out_specs=row_spec,
        compiler_params=params,
        cost_estimate=pl.CostEstimate(flops=3 * T * NH, transcendentals=0,
                                      bytes_accessed=3 * T * NH * 4),
    )(r2, v2, mean_l, inv_l)
    return adv2.reshape(T, N, H)


# ---------------------------------------------------------------------------
# Kernel group 2: PPO minibatch loss partial sums
#   ratio       = exp(logp - old_logp)
#   action_loss = -min(ratio*adv, clip(ratio)*adv)
#   value_loss  = 0.5*max((v-R)^2, (clip(v)-R)^2)   (or unclipped variant)
# Inputs are viewed as (rows, L) with head = lane % L's H-period; per-tile per-lane
# partial sums (1, 1, L) are written lane-dense and combined per head in plain JAX.
# ---------------------------------------------------------------------------
def _ppo_loss_kernel(alp_ref, old_ref, adv_ref, val_ref, vpred_ref, ret_ref,
                     a_ref, v_ref, *, clip_param, use_clipped_value_loss):
    alp = alp_ref[...].astype(jnp.float32)
    old = old_ref[...].astype(jnp.float32)
    adv = adv_ref[...].astype(jnp.float32)
    values = val_ref[...].astype(jnp.float32)
    vpred = vpred_ref[...].astype(jnp.float32)
    ret = ret_ref[...].astype(jnp.float32)

    ratio = jnp.exp(alp - old)
    surr1 = ratio * adv
    surr2 = jnp.clip(ratio, 1.0 - clip_param, 1.0 + clip_param) * adv
    action_loss = -jnp.minimum(surr1, surr2)

    if use_clipped_value_loss:
        vpc = vpred + jnp.clip(values - vpred, -clip_param, clip_param)
        value_loss = 0.5 * jnp.maximum((values - ret) ** 2, (vpc - ret) ** 2)
    else:
        value_loss = 0.5 * (ret - values) ** 2

    a_ref[...] = jnp.sum(action_loss, axis=0, keepdims=True)[None]     # (1, 1, L)
    v_ref[...] = jnp.sum(value_loss, axis=0, keepdims=True)[None]


def ppo_loss(action_log_probs, old_action_log_probs, adv_targ, values, value_preds,
             returns, dist_entropy, *, clip_param=0.2, value_loss_coef=0.5,
             entropy_coef=0.01, use_clipped_value_loss=True, behavioral_index=0,
             importance_weight=False, max_lanes=2048, row_block=None):
    B, H = action_log_probs.shape

    # torch: old_action_log_probs_batch[:, 1 - bi] = old_action_log_probs_batch[:, bi]
    if importance_weight and H > 1:
        old_action_log_probs = old_action_log_probs.at[:, 1 - behavioral_index].set(
            old_action_log_probs[:, behavioral_index])

    L = _lane_layout(B, H, max_lanes=max_lanes)
    rows = (B * H) // L
    if rows % 8 == 0:
        tr = row_block if (row_block and rows % row_block == 0 and row_block % 8 == 0) \
            else _row_tile(rows, L)
    else:
        tr = rows
    n_t = rows // tr

    def view(x):
        # Free reshape of the row-major (B, H) array; since L % H == 0, lane c of any
        # row always belongs to head c % H.
        return x.reshape(rows, L)

    ins = [view(x) for x in (action_log_probs, old_action_log_probs, adv_targ,
                             values, value_preds, returns)]

    kernel = functools.partial(_ppo_loss_kernel,
                               clip_param=float(clip_param),
                               use_clipped_value_loss=bool(use_clipped_value_loss))
    in_spec = pl.BlockSpec((tr, L), lambda i: (i, 0))
    out_spec = pl.BlockSpec((1, 1, L), lambda i: (i, 0, 0))

    a_part, v_part = pl.pallas_call(
        kernel,
        grid=(n_t,),
        out_shape=(jax.ShapeDtypeStruct((n_t, 1, L), jnp.float32),
                   jax.ShapeDtypeStruct((n_t, 1, L), jnp.float32)),
        in_specs=[in_spec] * 6,
        out_specs=(out_spec, out_spec),
        compiler_params=pltpu.CompilerParams(dimension_semantics=("parallel",),
                                             vmem_limit_bytes=_VMEM_LIMIT),
        cost_estimate=pl.CostEstimate(flops=22 * B * H, transcendentals=B * H,
                                      bytes_accessed=(6 * B * H + 2 * n_t * L) * 4),
    )(*ins)

    # O(n_t * L) finalize in plain JAX (mirrors torch's loss_per_head_and_total).
    action_losses = a_part.reshape(n_t, L // H, H).sum(axis=(0, 1)) / B     # (H,)
    value_losses = v_part.reshape(n_t, L // H, H).sum(axis=(0, 1)) / B      # (H,)
    dist_entropy_loss = dist_entropy.mean()
    if behavioral_index == 1 and H > 1:
        action_loss_total = action_losses[1]
        value_loss_total = value_losses[1]
    else:
        action_loss_total = action_losses.mean()
        value_loss_total = value_losses.mean()
    total_loss = (value_loss_total * value_loss_coef
                  + action_loss_total
                  - dist_entropy_loss * entropy_coef)
    return action_losses, value_losses, total_loss


# ---------------------------------------------------------------------------
# Pure-JAX references (mirror the torch code) for sanity checking.
# ---------------------------------------------------------------------------
def _ref_advantages(returns, value_preds):
    adv = returns[:-1] - value_preds[:-1]
    flat = adv.reshape(-1, adv.shape[-1])
    mean = flat.mean(axis=0)
    std = jnp.sqrt(jnp.sum((flat - mean) ** 2, axis=0) / (flat.shape[0] - 1))
    return (adv - mean) / (std + EPS_PPO)


def _ref_loss(alp, old, adv, values, vpred, ret, dent, clip_param, v_coef, e_coef):
    ratio = jnp.exp(alp - old)
    surr1 = ratio * adv
    surr2 = jnp.clip(ratio, 1 - clip_param, 1 + clip_param) * adv
    a_losses = (-jnp.minimum(surr1, surr2)).mean(axis=0)
    vpc = vpred + jnp.clip(values - vpred, -clip_param, clip_param)
    v_losses = (0.5 * jnp.maximum((values - ret) ** 2, (vpc - ret) ** 2)).mean(axis=0)
    total = v_losses.mean() * v_coef + a_losses.mean() - dent.mean() * e_coef
    return a_losses, v_losses, total


if __name__ == "__main__":
    key = jax.random.PRNGKey(0)
    T, N, H = 64, 16, 4              # timesteps, envs, value/policy heads
    B = T * N                        # 1024 minibatch rows

    ks = jax.random.split(key, 8)
    returns = jax.random.normal(ks[0], (T + 1, N, H), jnp.float32)
    value_preds = jax.random.normal(ks[1], (T + 1, N, H), jnp.float32)

    # --- advantages kernels (normalized + raw paths) ---
    advantages = get_advantages(returns, value_preds, use_normalized_advantage=True)
    jax.block_until_ready(advantages)
    adv_ref = _ref_advantages(returns, value_preds)
    assert jnp.allclose(advantages, adv_ref, atol=1e-4, rtol=1e-4), "advantage mismatch"

    adv_raw = get_advantages(returns, value_preds, use_normalized_advantage=False)
    jax.block_until_ready(adv_raw)
    assert jnp.allclose(adv_raw, returns[:-1] - value_preds[:-1], atol=1e-6), \
        "unnormalized advantage mismatch"

    # --- minibatch PPO loss kernel ---
    adv_targ = advantages.reshape(B, H)
    action_log_probs = 0.1 * jax.random.normal(ks[2], (B, H), jnp.float32)
    old_action_log_probs = 0.1 * jax.random.normal(ks[3], (B, H), jnp.float32)
    values = jax.random.normal(ks[4], (B, H), jnp.float32)
    value_preds_b = jax.random.normal(ks[5], (B, H), jnp.float32)
    return_b = jax.random.normal(ks[6], (B, H), jnp.float32)
    dist_entropy = jnp.abs(jax.random.normal(ks[7], (1, H), jnp.float32))

    clip_param, v_coef, e_coef = 0.2, 0.5, 0.01
    a_losses, v_losses, total = ppo_loss(
        action_log_probs, old_action_log_probs, adv_targ, values, value_preds_b,
        return_b, dist_entropy, clip_param=clip_param, value_loss_coef=v_coef,
        entropy_coef=e_coef, use_clipped_value_loss=True)
    jax.block_until_ready((a_losses, v_losses, total))

    ra, rv, rt = _ref_loss(action_log_probs, old_action_log_probs, adv_targ, values,
                           value_preds_b, return_b, dist_entropy, clip_param, v_coef, e_coef)
    assert jnp.allclose(a_losses, ra, atol=1e-4, rtol=1e-4), "action loss mismatch"
    assert jnp.allclose(v_losses, rv, atol=1e-4, rtol=1e-4), "value loss mismatch"
    assert jnp.allclose(total, rt, atol=1e-4, rtol=1e-4), "total loss mismatch"

    # behavioral_index == 1 branch (totals use head 1 only), matching torch semantics.
    _, _, total_b1 = ppo_loss(
        action_log_probs, old_action_log_probs, adv_targ, values, value_preds_b,
        return_b, dist_entropy, clip_param=clip_param, value_loss_coef=v_coef,
        entropy_coef=e_coef, use_clipped_value_loss=True, behavioral_index=1)
    jax.block_until_ready(total_b1)
    ref_b1 = rv[1] * v_coef + ra[1] - dist_entropy.mean() * e_coef
    assert jnp.allclose(total_b1, ref_b1, atol=1e-4, rtol=1e-4), "behavioral_index mismatch"

    print("KERNEL_OK")
</pallas_src>

<mosaic_0001>
module attributes {stable_mosaic.version = 11 : i64} {
  func.func @_adv_stats_kernel(%arg0: i32, %arg1: memref<32x64xf32, #tpu.memory_space<vmem>>, %arg2: memref<32x64xf32, #tpu.memory_space<vmem>>, %arg3: memref<1x1x64xf32, #tpu.memory_space<vmem>>, %arg4: memref<1x1x64xf32, #tpu.memory_space<vmem>>) attributes {dimension_semantics = [#tpu.dimension_semantics<parallel>], iteration_bounds = array<i64: 2>, scalar_prefetch = 0 : i64, scratch_operands = 0 : i64, tpu.core_type = #tpu.core_type<tc>, window_params = [{transform_indices = @transform_0, window_bounds = array<i64: 32, 64>}, {transform_indices = @transform_1, window_bounds = array<i64: 32, 64>}, {transform_indices = @transform_2, window_bounds = array<i64: 1, 1, 64>}, {transform_indices = @transform_3, window_bounds = array<i64: 1, 1, 64>}]} {
    %c0 = arith.constant 0 : index
    %c0_0 = arith.constant 0 : index
    %0 = vector.load %arg1[%c0, %c0_0] : memref<32x64xf32, #tpu.memory_space<vmem>>, vector<32x64xf32>
    %c0_1 = arith.constant 0 : index
    %c0_2 = arith.constant 0 : index
    %1 = vector.load %arg2[%c0_1, %c0_2] : memref<32x64xf32, #tpu.memory_space<vmem>>, vector<32x64xf32>
    %2 = arith.subf %0, %1 : vector<32x64xf32>
    %cst = arith.constant dense<0.000000e+00> : vector<64xf32>
    %3 = vector.multi_reduction <add>, %2, %cst [0] : vector<32x64xf32> to vector<64xf32>
    %4 = vector.shape_cast %3 : vector<64xf32> to vector<1x64xf32>
    %cst_3 = arith.constant 3.125000e-02 : f32
    %5 = vector.broadcast %cst_3 : f32 to vector<1x64xf32>
    %6 = arith.mulf %4, %5 : vector<1x64xf32>
    %7 = vector.broadcast %6 : vector<1x64xf32> to vector<32x64xf32>
    %8 = arith.subf %2, %7 : vector<32x64xf32>
    %9 = vector.shape_cast %4 : vector<1x64xf32> to vector<1x1x64xf32>
    %c0_4 = arith.constant 0 : index
    %c0_5 = arith.constant 0 : index
    %c0_6 = arith.constant 0 : index
    %10 = vector.load %arg3[%c0_4, %c0_5, %c0_6] : memref<1x1x64xf32, #tpu.memory_space<vmem>>, vector<1x1x64xf32>
    tpu.vector_store %arg3[%c0_4, %c0_5, %c0_6], %9 {strides = array<i32>} : memref<1x1x64xf32, #tpu.memory_space<vmem>>, vector<1x1x64xf32>,
    %11 = arith.mulf %8, %8 : vector<32x64xf32>
    %cst_7 = arith.constant dense<0.000000e+00> : vector<64xf32>
    %12 = vector.multi_reduction <add>, %11, %cst_7 [0] : vector<32x64xf32> to vector<64xf32>
    %13 = vector.shape_cast %12 : vector<64xf32> to vector<1x64xf32>
    %14 = vector.shape_cast %13 : vector<1x64xf32> to vector<1x1x64xf32>
    %c0_8 = arith.constant 0 : index
    %c0_9 = arith.constant 0 : index
    %c0_10 = arith.constant 0 : index
    %15 = vector.load %arg4[%c0_8, %c0_9, %c0_10] : memref<1x1x64xf32, #tpu.memory_space<vmem>>, vector<1x1x64xf32>
    tpu.vector_store %arg4[%c0_8, %c0_9, %c0_10], %14 {strides = array<i32>} : memref<1x1x64xf32, #tpu.memory_space<vmem>>, vector<1x1x64xf32>,
    return
  }
  func.func @transform_0(%arg0: i32) -> (i32, i32) {
    %c0_i32 = arith.constant 0 : i32
    %c0_i32_0 = arith.constant 0 : i32
    return %arg0, %c0_i32 : i32, i32
  }
  func.func @transform_1(%arg0: i32) -> (i32, i32) {
    %c0_i32 = arith.constant 0 : i32
    %c0_i32_0 = arith.constant 0 : i32
    return %arg0, %c0_i32 : i32, i32
  }
  func.func @transform_2(%arg0: i32) -> (i32, i32, i32) {
    %c0_i32 = arith.constant 0 : i32
    %c0_i32_0 = arith.constant 0 : i32
    %c0_i32_1 = arith.constant 0 : i32
    return %arg0, %c0_i32, %c0_i32_0 : i32, i32, i32
  }
  func.func @transform_3(%arg0: i32) -> (i32, i32, i32) {
    %c0_i32 = arith.constant 0 : i32
    %c0_i32_0 = arith.constant 0 : i32
    %c0_i32_1 = arith.constant 0 : i32
    return %arg0, %c0_i32, %c0_i32_0 : i32, i32, i32
  }
}

</mosaic_0001>

<llo_original>
// kernel: tpu_custom_call.1
$region0: #{tpu_custom_call.1}
  #allocation0 [shape = 'u32[]', space=smem, size = 0x4, offset = 0x4, fixed_abs, tag = 'smem constant byte address 0x4 - core index']
  #allocation1 [shape = 'u32[144,128]{1,0:T(1,128)}', space=vmem, size = 0x12000, scoped, tag = 'internal scratch']
  %s0 = inlined_call_operand.vmem [shape: f32[65,64], index: 0, kind: input, shape index: {}]
  %s1 = inlined_call_operand.vmem [shape: f32[65,64], index: 1, kind: input, shape index: {}]
  %s2 = inlined_call_operand.hbm [shape: f32[2,1,64], index: 2, kind: output, shape index: {0}]
  %s3 = inlined_call_operand.hbm [shape: f32[2,1,64], index: 3, kind: output, shape index: {1}]
  %4 = xla_tuple %s2, %s3
  %s5 = sld [smem:[#allocation0]]
  $region49: #{tpu_custom_call.1} parent=0
    _
  %s7 = ssub.s32 1, %s5
  %s8 = scalar_select 0, %s7, %s5
  $region1: #{tpu_custom_call.1} parent=0
    #allocation2 [shape = 'u8[1024]{0}', space=vmem, size = 0x400, scoped, tag = 'output window, operand 0']
    #allocation3 [shape = 's32[2]{0}', space=sflag, size = 0x8, scoped, tag = 'scoped memory for tpu_custom_call.1']
    #allocation4 [shape = 'u8[1024]{0}', space=vmem, size = 0x400, scoped, tag = 'output window, operand 1']
    #allocation5 [shape = 's32[2]{0}', space=sflag, size = 0x8, scoped, tag = 'scoped memory for tpu_custom_call.1']
    %9 = vsyncpa [#allocation3], 0
    %s10 = scalar_lea.sflag [#allocation3], 1
    %11 = vsyncpa %s10, 0
    %12 = vsyncpa [#allocation5], 0
    %s13 = scalar_lea.sflag [#allocation5], 1
    %14 = vsyncpa %s13, 0
    loop: start=0, step=1, limit=4
    $region2: #{tpu_custom_call.1} parent=1 // loop_pre_header
      _
    $region3: #{tpu_custom_call.1} parent=1 // loop_header
      %s16 = sphi 0, %s20
      %p17 = scmp.ge.s32.totalorder %s16, 4
      %s26 = sphi 0, %s28
      %s29 = sphi 0, %s26
      %s30 = sphi 0, %s29
      %s46 = sphi 0, %s30
      %s52 = sphi 0, %s54
      %s55 = sphi 0, %s52
      %s56 = sphi 0, %s55
      %s72 = sphi 0, %s56
      %s78 = sphi 0, %s80
      %s81 = sphi 0, %s78
      %s82 = sphi 0, %s81
      %s98 = sphi 0, %s82
      %s104 = sphi 0, %s106
      %s107 = sphi 0, %s104
      %s108 = sphi 0, %s107
      %s124 = sphi 0, %s108
    $region4: #{tpu_custom_call.1} parent=1 // loop_header_branch
      %19 = sbr.rel (%p17) target = $region8
    $region5: #{tpu_custom_call.1} parent=1 // loop_body
      %s21 = ssub.s32 %s16, 1
      %s22 = ssub.s32 %s16, 2
      %s23 = sadd.s32 %s16, 1
      %s24 = ssub.s32 %s16, %s23
      %p25 = scmp.eq.s32.totalorder %s24, 0
      %s27 = sadd.s32 %s26, 1
      %s28 = scalar_select %p25, %s26, %s27
      %p31 = pneg %p25
      %p32 = scmp.eq.s32.totalorder %s16, 1
      %p33 = por %p31, %p32
      %p34 = scmp.ne.s32.totalorder %s26, %s29
      %p35 = scmp.eq.s32.totalorder %s16, 0
      %p36 = por %p34, %p35
      %p37 = scmp.ne.s32.totalorder %s26, %s29
      %p38 = scmp.eq.s32.totalorder %s21, 1
      %p39 = por %p37, %p38
      %p40 = scmp.ne.s32.totalorder %s29, %s30
      %p41 = scmp.eq.s32.totalorder %s21, 0
      %p42 = por %p40, %p41
      %p43 = scmp.ne.s32.totalorder %s29, %s30
      %p44 = scmp.eq.s32.totalorder %s22, 1
      %p45 = por %p43, %p44
      %p47 = scmp.ne.s32.totalorder %s30, %s46
      %p48 = scmp.eq.s32.totalorder %s22, 0
      %p49 = por %p47, %p48
      %s50 = ssub.s32 %s16, %s23
      %p51 = scmp.eq.s32.totalorder %s50, 0
      %s53 = sadd.s32 %s52, 1
      %s54 = scalar_select %p51, %s52, %s53
      %p57 = pneg %p51
      %p58 = scmp.eq.s32.totalorder %s16, 1
      %p59 = por %p57, %p58
      %p60 = scmp.ne.s32.totalorder %s52, %s55
      %p61 = scmp.eq.s32.totalorder %s16, 0
      %p62 = por %p60, %p61
      %p63 = scmp.ne.s32.totalorder %s52, %s55
      %p64 = scmp.eq.s32.totalorder %s21, 1
      %p65 = por %p63, %p64
      %p66 = scmp.ne.s32.totalorder %s55, %s56
      %p67 = scmp.eq.s32.totalorder %s21, 0
      %p68 = por %p66, %p67
      %p69 = scmp.ne.s32.totalorder %s55, %s56
      %p70 = scmp.eq.s32.totalorder %s22, 1
      %p71 = por %p69, %p70
      %p73 = scmp.ne.s32.totalorder %s56, %s72
      %p74 = scmp.eq.s32.totalorder %s22, 0
      %p75 = por %p73, %p74
      %s76 = ssub.s32 %s16, %s23
      %p77 = scmp.eq.s32.totalorder %s76, 0
      %s79 = sadd.s32 %s78, 1
      %s80 = scalar_select %p77, %s78, %s79
      %p83 = pneg %p77
      %p84 = scmp.eq.s32.totalorder %s16, 1
      %p85 = por %p83, %p84
      %p86 = scmp.ne.s32.totalorder %s78, %s81
      %p87 = scmp.eq.s32.totalorder %s16, 0
      %p88 = por %p86, %p87
      %p89 = scmp.ne.s32.totalorder %s78, %s81
      %p90 = scmp.eq.s32.totalorder %s21, 1
      %p91 = por %p89, %p90
      %p92 = scmp.ne.s32.totalorder %s81, %s82
      %p93 = scmp.eq.s32.totalorder %s21, 0
      %p94 = por %p92, %p93
      %p95 = scmp.ne.s32.totalorder %s81, %s82
      %p96 = scmp.eq.s32.totalorder %s22, 1
      %p97 = por %p95, %p96
      %p99 = scmp.ne.s32.totalorder %s82, %s98
      %p100 = scmp.eq.s32.totalorder %s22, 0
      %p101 = por %p99, %p100
      %s102 = ssub.s32 %s16, %s23
      %p103 = scmp.eq.s32.totalorder %s102, 0
      %s105 = sadd.s32 %s104, 1
      %s106 = scalar_select %p103, %s104, %s105
      %p109 = pneg %p103
      %p110 = scmp.eq.s32.totalorder %s16, 1
      %p111 = por %p109, %p110
      %p112 = scmp.ne.s32.totalorder %s104, %s107
      %p113 = scmp.eq.s32.totalorder %s16, 0
      %p114 = por %p112, %p113
      %p115 = scmp.ne.s32.totalorder %s104, %s107
      %p116 = scmp.eq.s32.totalorder %s21, 1
      %p117 = por %p115, %p116
      %p118 = scmp.ne.s32.totalorder %s107, %s108
      %p119 = scmp.eq.s32.totalorder %s21, 0
      %p120 = por %p118, %p119
      %p121 = scmp.ne.s32.totalorder %s107, %s108
      %p122 = scmp.eq.s32.totalorder %s22, 1
      %p123 = por %p121, %p122
      %p125 = scmp.ne.s32.totalorder %s108, %s124
      %p126 = scmp.eq.s32.totalorder %s22, 0
      %p127 = por %p125, %p126
      %p128 = scmp.le.s32.totalorder 1, %s16
      %p129 = scmp.lt.s32.totalorder %s16, 3
      %p130 = pnand %p128, %p129
      %p131 = pneg %p130
      // Predicated region
      $region9: #{tpu_custom_call.1} parent=5 // pred_check
        _
      $region10: #{tpu_custom_call.1} parent=5 // pred_check_branch
        %133 = sbr.rel (%p130) target = $region12
      $region11: #{tpu_custom_call.1} parent=5 // pred_region
        %s134 = ssub.s32 %s16, 1
      $region12: #{tpu_custom_call.1} parent=5 // pred_fallthru
        _
      %p135 = scmp.lt.s32.totalorder %s16, 2
      // Predicated region
      $region13: #{tpu_custom_call.1} parent=5 // pred_check
        %p136 = pneg %p135
      $region14: #{tpu_custom_call.1} parent=5 // pred_check_branch
        %138 = sbr.rel (%p136) target = $region16
      $region15: #{tpu_custom_call.1} parent=5 // pred_region
        // Predicated region
        $region17: #{tpu_custom_call.1} parent=15 // pred_check
          %p139 = pneg %p36
        $region18: #{tpu_custom_call.1} parent=15 // pred_check_branch
          %141 = sbr.rel (%p139) target = $region20
        $region19: #{tpu_custom_call.1} parent=15 // pred_region
          %s142 = smul.u32 4, %s16
          %s143 = ssub.s32 9, %s142
          %p144 = scmp.lt.s32.totalorder %s143, 4
          %s145 = scalar_select %p144, %s143, 4
          %s146 = smul.u32 128, %s145
          %p147 = scmp.lt.s32.totalorder %s142, 8
          %s148 = scalar_select %p147, %s142, 8
          %s149 = smul.addr %s148, 8
          %s150 = scalar_lea.vmem %s0, %s149
          %s151 = smul.u32 4, %s16
          %s152 = ssub.s32 9, %s151
          %p153 = scmp.lt.s32.totalorder %s152, 4
          %s154 = scalar_select %p153, %s152, 4
          %s155 = smul.u32 128, %s154
        $region20: #{tpu_custom_call.1} parent=15 // pred_fallthru
          _
        // Predicated region
        $region21: #{tpu_custom_call.1} parent=15 // pred_check
          %p156 = pneg %p62
        $region22: #{tpu_custom_call.1} parent=15 // pred_check_branch
          %158 = sbr.rel (%p156) target = $region24
        $region23: #{tpu_custom_call.1} parent=15 // pred_region
          %s159 = smul.u32 4, %s16
          %s160 = ssub.s32 9, %s159
          %p161 = scmp.lt.s32.totalorder %s160, 4
          %s162 = scalar_select %p161, %s160, 4
          %s163 = smul.u32 128, %s162
          %p164 = scmp.lt.s32.totalorder %s159, 8
          %s165 = scalar_select %p164, %s159, 8
          %s166 = smul.addr %s165, 8
          %s167 = scalar_lea.vmem %s1, %s166
          %s168 = smul.u32 4, %s16
          %s169 = ssub.s32 9, %s168
          %p170 = scmp.lt.s32.totalorder %s169, 4
          %s171 = scalar_select %p170, %s169, 4
          %s172 = smul.u32 128, %s171
        $region24: #{tpu_custom_call.1} parent=15 // pred_fallthru
          _
      $region16: #{tpu_custom_call.1} parent=5 // pred_fallthru
        _
      %p173 = scmp.le.s32.totalorder 1, %s16
      %p174 = scmp.lt.s32.totalorder %s16, 3
      %p175 = pnand %p173, %p174
      %p176 = pneg %p175
      // Predicated region
      $region25: #{tpu_custom_call.1} parent=5 // pred_check
        _
      $region26: #{tpu_custom_call.1} parent=5 // pred_check_branch
        %178 = sbr.rel (%p175) target = $region28
      $region27: #{tpu_custom_call.1} parent=5 // pred_region
        %s179 = ssub.s32 %s16, 1
        %s180 = smul.u32 4, %s21
        %s181 = ssub.s32 9, %s180
        %p182 = scmp.lt.s32.totalorder %s181, 4
        %s183 = scalar_select %p182, %s181, 4
        %s184 = smul.u32 128, %s183
        %p185 = scmp.lt.s32.totalorder %s180, 8
        %s186 = scalar_select %p185, %s180, 8
        %s187 = smul.addr %s186, 8
        %s188 = scalar_lea.vmem %s0, %s187
        %p189 = pneg %p42
        %p190 = pneg %p39
        %s191 = smul.u32 4, %s21
        %s192 = ssub.s32 9, %s191
        %p193 = scmp.lt.s32.totalorder %s192, 4
        %s194 = scalar_select %p193, %s192, 4
        %s195 = smul.u32 128, %s194
        %p196 = scmp.lt.s32.totalorder %s191, 8
        %s197 = scalar_select %p196, %s191, 8
        %s198 = smul.addr %s197, 8
        %s199 = scalar_lea.vmem %s1, %s198
        %p200 = pneg %p68
        %p201 = pneg %p65
        %p202 = pneg %p94
        %p203 = pneg %p91
        %s204 = sand.u32 %s81, 1
        %s205 = scalar_lea.sflag [#allocation3], %s204
        %s206 = sand.u32 %s81, 1
        %s207 = scalar_lea.vmem [#allocation2], %s206
        %p208 = pneg %p120
        %p209 = pneg %p117
        %s210 = sand.u32 %s107, 1
        %s211 = scalar_lea.sflag [#allocation5], %s210
        %s212 = sand.u32 %s107, 1
        %s213 = scalar_lea.vmem [#allocation4], %s212
        %s214 = smul.u32 4, %s21
        %s215 = ssub.s32 9, %s214
        %p216 = scmp.lt.s32.totalorder %s215, 4
        %s217 = scalar_select %p216, %s215, 4
        %s218 = smul.u32 128, %s217
        %p219 = scmp.lt.s32.totalorder %s214, 8
        %s220 = scalar_select %p219, %s214, 8
        %s221 = smul.addr %s220, 8
        %s222 = scalar_lea.vmem %s0, %s221
        %s223 = smul.u32 4, %s21
        %s224 = ssub.s32 9, %s223
        %p225 = scmp.lt.s32.totalorder %s224, 4
        %s226 = scalar_select %p225, %s224, 4
        %s227 = smul.u32 128, %s226
        %s228 = smul.u32 4, %s21
        %s229 = ssub.s32 9, %s228
        %p230 = scmp.lt.s32.totalorder %s229, 4
        %s231 = scalar_select %p230, %s229, 4
        %s232 = smul.u32 128, %s231
        %p233 = scmp.lt.s32.totalorder %s228, 8
        %s234 = scalar_select %p233, %s228, 8
        %s235 = smul.addr %s234, 8
        %s236 = scalar_lea.vmem %s1, %s235
        %s237 = smul.u32 4, %s21
        %s238 = ssub.s32 9, %s237
        %p239 = scmp.lt.s32.totalorder %s238, 4
        %s240 = scalar_select %p239, %s238, 4
        %s241 = smul.u32 128, %s240
        %v242 = vld [vmem:[%s222] sm:$0xff]
        %v243 = vld [vmem:[%s222 + $0x8] sm:$0xff]
        %v244 = vld [vmem:[%s222 + $0x10] sm:$0xff]
        %v245 = vld [vmem:[%s222 + $0x18] sm:$0xff]
        %v246 = vld [vmem:[%s236] sm:$0xff]
        %v247 = vld [vmem:[%s236 + $0x8] sm:$0xff]
        %v248 = vld [vmem:[%s236 + $0x10] sm:$0xff]
        %v249 = vld [vmem:[%s236 + $0x18] sm:$0xff]
        %v250 = vsub.f32 %v242, %v246
        %v251 = vsub.f32 %v243, %v247
        %v252 = vsub.f32 %v244, %v248
        %v253 = vsub.f32 %v245, %v249
        %vm254 = vcmask 523264
        %v255 = vsel %vm254, %v250, 0.0
        %v256 = vsel %vm254, %v251, 0.0
        %v257 = vadd.f32 %v255, %v256
        %v258 = vsel %vm254, %v252, 0.0
        %v259 = vadd.f32 %v257, %v258
        %v260 = vsel %vm254, %v253, 0.0
        %v261 = vadd.f32 %v259, %v260
        %v262 = vrot.slane %v261, 4
        %v263 = vadd.f32 %v261, %v262
        %v264 = vrot.slane %v263, 2
        %v265 = vadd.f32 %v263, %v264
        %v266 = vrot.slane %v265, 1
        %v267 = vadd.f32 %v265, %v266
        %v268 = vmul.f32 %v267, 0.03125
        %v269 = vsub.f32 %v250, %v268
        %v270 = vsub.f32 %v251, %v268
        %v271 = vsub.f32 %v252, %v268
        %v272 = vsub.f32 %v253, %v268
        %vm273 = vcmask 516096
        %274 = vst.msk [vmem:[%s207] sm:$0x1] %vm273, %v267
        %v275 = vmul.f32 %v269, %v269
        %v276 = vmul.f32 %v270, %v270
        %v277 = vmul.f32 %v271, %v271
        %v278 = vmul.f32 %v272, %v272
        %v279 = vsel %vm254, %v275, 0.0
        %v280 = vsel %vm254, %v276, 0.0
        %v281 = vadd.f32 %v279, %v280
        %v282 = vsel %vm254, %v277, 0.0
        %v283 = vadd.f32 %v281, %v282
        %v284 = vsel %vm254, %v278, 0.0
        %v285 = vadd.f32 %v283, %v284
        %v286 = vrot.slane %v285, 4
        %v287 = vadd.f32 %v285, %v286
        %v288 = vrot.slane %v287, 2
        %v289 = vadd.f32 %v287, %v288
        %v290 = vrot.slane %v289, 1
        %v291 = vadd.f32 %v289, %v290
        %292 = vst.msk [vmem:[%s213] sm:$0x1] %vm273, %v291
        %s293 = sand.u32 %s81, 1
        %s294 = scalar_lea.sflag [#allocation3], %s293
        %s295 = sand.u32 %s81, 1
        %s296 = scalar_lea.vmem [#allocation2], %s295
        %s297 = sand.u32 %s107, 1
        %s298 = scalar_lea.sflag [#allocation5], %s297
        %s299 = sand.u32 %s107, 1
        %s300 = scalar_lea.vmem [#allocation4], %s299
        // Predicated region
        $region29: #{tpu_custom_call.1} parent=27 // pred_check
          %p301 = pneg %p91
        $region30: #{tpu_custom_call.1} parent=27 // pred_check_branch
          %303 = sbr.rel (%p301) target = $region32
        $region31: #{tpu_custom_call.1} parent=27 // pred_region
          %s305 = ssub.s32 16, 16
          %306 = vsyncadd %s294, %s305
          %s307 = smul.addr %s21, 16
          %s308 = scalar_lea.hbm %s2, %s307
          %s310 = sshll.u32 %s296, 4
          %s311 = int_to_ptr.vmem [resolvable:$true] %s310
          %313 = dma.vmem_to_hbm [thread:$0]  %s311, 16, %s308, %s294
        $region32: #{tpu_custom_call.1} parent=27 // pred_fallthru
          _
        // Predicated region
        $region33: #{tpu_custom_call.1} parent=27 // pred_check
          %p314 = pneg %p117
        $region34: #{tpu_custom_call.1} parent=27 // pred_check_branch
          %316 = sbr.rel (%p314) target = $region36
        $region35: #{tpu_custom_call.1} parent=27 // pred_region
          %s318 = ssub.s32 16, 16
          %319 = vsyncadd %s298, %s318
          %s320 = smul.addr %s21, 16
          %s321 = scalar_lea.hbm %s3, %s320
          %s323 = sshll.u32 %s300, 4
          %s324 = int_to_ptr.vmem [resolvable:$true] %s323
          %326 = dma.vmem_to_hbm [thread:$0]  %s324, 16, %s321, %s298
        $region36: #{tpu_custom_call.1} parent=27 // pred_fallthru
          _
      $region28: #{tpu_custom_call.1} parent=5 // pred_fallthru
        _
      %p327 = scmp.le.s32.totalorder 2, %s16
      // Predicated region
      $region37: #{tpu_custom_call.1} parent=5 // pred_check
        %p328 = pneg %p327
      $region38: #{tpu_custom_call.1} parent=5 // pred_check_branch
        %330 = sbr.rel (%p328) target = $region40
      $region39: #{tpu_custom_call.1} parent=5 // pred_region
        %s331 = ssub.s32 %s16, 2
        // Predicated region
        $region41: #{tpu_custom_call.1} parent=39 // pred_check
          %p332 = pneg %p97
        $region42: #{tpu_custom_call.1} parent=39 // pred_check_branch
          %334 = sbr.rel (%p332) target = $region44
        $region43: #{tpu_custom_call.1} parent=39 // pred_region
          %s335 = sand.u32 %s82, 1
          %s336 = scalar_lea.sflag [#allocation3], %s335
          %s337 = sand.u32 %s82, 1
          %s338 = scalar_lea.vmem [#allocation2], %s337
          %339 = dma.done %s336, 16
        $region44: #{tpu_custom_call.1} parent=39 // pred_fallthru
          _
        // Predicated region
        $region45: #{tpu_custom_call.1} parent=39 // pred_check
          %p340 = pneg %p123
        $region46: #{tpu_custom_call.1} parent=39 // pred_check_branch
          %342 = sbr.rel (%p340) target = $region48
        $region47: #{tpu_custom_call.1} parent=39 // pred_region
          %s343 = sand.u32 %s108, 1
          %s344 = scalar_lea.sflag [#allocation5], %s343
          %s345 = sand.u32 %s108, 1
          %s346 = scalar_lea.vmem [#allocation4], %s345
          %347 = dma.done %s344, 16
        $region48: #{tpu_custom_call.1} parent=39 // pred_fallthru
          _
      $region40: #{tpu_custom_call.1} parent=5 // pred_fallthru
        _
    $region6: #{tpu_custom_call.1} parent=1 // loop_footer
      %s20 = sadd.s32 1, %s16
    $region7: #{tpu_custom_call.1} parent=1 // loop_footer_branch
      %15 = sbr.rel target = $region3
    $region8: #{tpu_custom_call.1} parent=1 // loop_exit
      _
    %348 = vsyncpa [#allocation3], 1
    %s349 = scalar_lea.sflag [#allocation3], 1
    %350 = vsyncpa %s349, 1
    %351 = vsyncpa [#allocation5], 1
    %s352 = scalar_lea.sflag [#allocation5], 1
    %353 = vsyncpa %s352, 1

</llo_original>
